<compile_context>
chip_gen: v7x
topology: tpu7x:2x2x1
jax: 0.10.0
libtpu: 0.0.40
codegen_flags: <defaults>
</compile_context>

<pallas_src>
import math
import numpy as np
import jax
import jax.numpy as jnp
from jax.experimental import pallas as pl
from jax.experimental.pallas import tpu as pltpu  # noqa: F401  (not needed for this gridless kernel)

# ---- model hyper-parameters (small, consistent with the module) -------------
N_SKILL = 20
EMB_DIM = 32           # emb_dim, divisible by num_heads
NUM_HEADS = 4
MAX_LEN = 8
BATCH = 2
SEQ = 8                # sequence length actually fed (<= MAX_LEN)
EPS = 1e-5             # nn.LayerNorm default eps
NEG_INF = -1e30        # additive mask value (finite -> no NaN through exp)


def _slab_offsets(e, nl, num_heads):
    """Row offsets inside the single packed (total, E) parameter slab."""
    g = num_heads * nl
    b0 = 6 * e                          # 12 bias rows start here
    hm0 = -(-(b0 + 12) // 8) * 8        # head-mask block, 8-row (sublane) aligned
    ab0 = hm0 + g                       # additive attention-bias block
    total = ab0 + g
    return b0, hm0, ab0, total


# ----------------------------- Pallas kernel ---------------------------------
def _make_sakt_kernel(n_batch, seq_len, num_heads):
    nl = n_batch * seq_len          # total rows (batch folded into the block)

    def kernel(x_ref, wb_ref, o_ref):
        # x_ref:  (2*NL, E)   rows [0:NL] = q embeddings, [NL:2NL] = qa (+pos)
        # wb_ref: (total, E)  [Wq*scale; Wkv; Wout; Wfc1; Wfc2;
        #                      bq*scale; bk; bv; bout; ln1w; ln1b; fc1b; fc2b;
        #                      ln2w; ln2b; pred_w; pred_b(bcast); pad;
        #                      head_mask (G,E); attn_bias (G,E first NL lanes)]
        e = x_ref.shape[-1]
        h = num_heads
        g = h * nl
        b0, hm0, ab0, _ = _slab_offsets(e, nl, h)

        q = x_ref[0:nl, :]           # (NL, E)
        qa = x_ref[nl:2 * nl, :]     # (NL, E)

        def nt(a, b):                # a @ b.T on the MXU, f32 accumulation
            return jax.lax.dot_general(
                a, b, (((1,), (1,)), ((), ())),
                preferred_element_type=jnp.float32)

        # ---- projections: Q (softmax scale pre-folded) and fused K|V -------
        qp = nt(q, wb_ref[0:e, :]) + wb_ref[b0:b0 + 1, :]          # (NL, E)
        kv = nt(qa, wb_ref[e:3 * e, :])                            # (NL, 2E), one matmul
        kp = kv[:, 0:e] + wb_ref[b0 + 1:b0 + 2, :]
        vp = kv[:, e:2 * e] + wb_ref[b0 + 2:b0 + 3, :]

        # ---- batched multi-head causal attention, masks are baked slab rows
        head_mask = wb_ref[hm0:hm0 + g, :]        # (G, E)  0/1, head selector
        attn_bias = wb_ref[ab0:ab0 + g, 0:nl]     # (G, NL) 0 / -1e30 additive
        q_stack = jnp.concatenate([qp] * h, axis=0) * head_mask    # (G, E)
        s = nt(q_stack, kp) + attn_bias                            # (G, NL)
        s = s - jnp.max(s, axis=-1, keepdims=True)                 # one reduce, all heads
        p = jnp.exp(s)
        p = p * pl.reciprocal(jnp.sum(p, axis=-1, keepdims=True), approx=True)
        ctx = jnp.dot(p, vp, preferred_element_type=jnp.float32) * head_mask
        attn = ctx[0:nl, :]                       # recombine head row-blocks
        for i in range(1, h):
            attn = attn + ctx[i * nl:(i + 1) * nl, :]

        attn = nt(attn, wb_ref[3 * e:4 * e, :]) + wb_ref[b0 + 3:b0 + 4, :]
        # TODO(synk): attention-weight dropout and FFN dropout are identity (eval mode).

        def layer_norm(xx, w_row, b_row):
            mu = jnp.mean(xx, axis=-1, keepdims=True)
            var = jnp.mean(jnp.square(xx - mu), axis=-1, keepdims=True)
            return (xx - mu) * jax.lax.rsqrt(var + EPS) * w_row + b_row

        # residual + LN1
        x1 = layer_norm(attn + q, wb_ref[b0 + 4:b0 + 5, :], wb_ref[b0 + 5:b0 + 6, :])

        # FFN: fc1 -> relu -> fc2
        h1 = jnp.maximum(nt(x1, wb_ref[4 * e:5 * e, :]) + wb_ref[b0 + 6:b0 + 7, :], 0.0)
        h2 = nt(h1, wb_ref[5 * e:6 * e, :]) + wb_ref[b0 + 7:b0 + 8, :]

        # residual + LN2
        x2 = layer_norm(h2 + x1, wb_ref[b0 + 8:b0 + 9, :], wb_ref[b0 + 9:b0 + 10, :])

        # prediction head: (1, E) x (NL, E)^T -> (1, NL) lane-dense, sigmoid
        logits = nt(wb_ref[b0 + 10:b0 + 11, :], x2) + wb_ref[b0 + 11:b0 + 12, 0:1]
        o_ref[...] = jax.nn.sigmoid(logits)

    return kernel


# ------------------------- one-time parameter packing -------------------------
def pack_params(params, n_batch, seq_len):
    """Called ONCE (not per forward): coalesce all parameters + compile-time
    masks into a single (total, E) slab; fold the softmax scale into Wq/bq."""
    e, h = EMB_DIM, NUM_HEADS
    nl = n_batch * seq_len
    dh = e // h
    g = h * nl
    b0, hm0, ab0, total = _slab_offsets(e, nl, h)
    scale = 1.0 / math.sqrt(dh)

    w_rows = jnp.concatenate([
        params["in_w"][:e] * scale,            # Wq (softmax scale folded in)
        params["in_w"][e:3 * e],               # Wk ; Wv  (fused K/V matmul)
        params["out_w"], params["fc1_w"], params["fc2_w"],
    ], axis=0)                                 # (6E, E)

    b_rows = jnp.stack([
        params["in_b"][:e] * scale,            # bq (scaled)
        params["in_b"][e:2 * e],               # bk
        params["in_b"][2 * e:3 * e],           # bv
        params["out_b"],
        params["ln1_w"], params["ln1_b"],
        params["fc1_b"], params["fc2_b"],
        params["ln2_w"], params["ln2_b"],
        params["pred_w"][0],
        jnp.full((e,), params["pred_b"][0], jnp.float32),
    ], axis=0)                                 # (12, E)

    # compile-time masks (numpy: nl/seq_len/h/e are Python ints)
    r = np.arange(g)[:, None]
    head_mask = (r // nl == np.arange(e)[None, :] // dh).astype(np.float32)  # (G, E)
    rs, cs = r % nl, np.arange(nl)[None, :]
    allowed = ((rs // seq_len) == (cs // seq_len)) & ((cs % seq_len) <= (rs % seq_len))
    attn_bias = np.zeros((g, e), np.float32)                                 # (G, E)
    attn_bias[:, :nl] = np.where(allowed, 0.0, NEG_INF)

    pad = jnp.zeros((hm0 - (b0 + 12), e), jnp.float32)
    wb = jnp.concatenate(
        [w_rows, b_rows, pad, jnp.asarray(head_mask), jnp.asarray(attn_bias)],
        axis=0).astype(jnp.float32)
    assert wb.shape == (total, e)

    return {"q_emb": params["q_emb"], "qa_emb": params["qa_emb"],
            "pos_emb": params["pos_emb"], "wb": wb}


# ------------------------------ wrapper ---------------------------------------
@jax.jit
def sakt_forward(q_idx, qa_idx, packed):
    n, l = q_idx.shape
    e = EMB_DIM
    nl = n * l

    # embedding lookups + positional add (glue, plain JAX)
    q_emb = jnp.take(packed["q_emb"], q_idx, axis=0).reshape(nl, e)
    qa_emb = (jnp.take(packed["qa_emb"], qa_idx, axis=0)
              + jnp.take(packed["pos_emb"], jnp.arange(l), axis=0)[None]
              ).reshape(nl, e)
    x = jnp.concatenate([q_emb, qa_emb], axis=0).astype(jnp.float32)   # (2*NL, E)

    out = pl.pallas_call(
        _make_sakt_kernel(n, l, NUM_HEADS),
        out_shape=jax.ShapeDtypeStruct((1, nl), jnp.float32),
    )(x, packed["wb"])
    return out.reshape(n, l)                                           # (N, L)


# --------------------------- pure-JAX reference -------------------------------
def sakt_reference(q_emb, qa_emb, params):
    E, H = EMB_DIM, NUM_HEADS
    Dh = E // H
    N, L, _ = q_emb.shape
    in_w, in_b = params["in_w"], params["in_b"]
    wq, wk, wv = in_w[:E], in_w[E:2 * E], in_w[2 * E:]
    bq, bk, bv = in_b[:E], in_b[E:2 * E], in_b[2 * E:]
    qp = (q_emb @ wq.T + bq).reshape(N, L, H, Dh).transpose(0, 2, 1, 3) / math.sqrt(Dh)
    kp = (qa_emb @ wk.T + bk).reshape(N, L, H, Dh).transpose(0, 2, 1, 3)
    vp = (qa_emb @ wv.T + bv).reshape(N, L, H, Dh).transpose(0, 2, 1, 3)
    s = jnp.einsum('nhqd,nhkd->nhqk', qp, kp)
    mask = jnp.tril(jnp.ones((L, L), dtype=bool))
    s = jnp.where(mask, s, -jnp.inf)
    p = jax.nn.softmax(s, axis=-1)
    attn = jnp.einsum('nhqk,nhkd->nhqd', p, vp).transpose(0, 2, 1, 3).reshape(N, L, E)
    attn = attn @ params["out_w"].T + params["out_b"]

    def ln(x, w, b):
        mu = x.mean(-1, keepdims=True)
        var = ((x - mu) ** 2).mean(-1, keepdims=True)
        return (x - mu) / jnp.sqrt(var + EPS) * w + b

    x1 = ln(attn + q_emb, params["ln1_w"], params["ln1_b"])
    h = jnp.maximum(x1 @ params["fc1_w"].T + params["fc1_b"], 0.0)
    h = h @ params["fc2_w"].T + params["fc2_b"]
    x2 = ln(h + x1, params["ln2_w"], params["ln2_b"])
    logits = x2 @ params["pred_w"].T + params["pred_b"]
    return jax.nn.sigmoid(logits)[..., 0]


# ------------------------------- parameters -----------------------------------
def init_params(key):
    E = EMB_DIM
    ks = jax.random.split(key, 12)
    s = 0.1

    q_emb = s * jax.random.normal(ks[0], (N_SKILL + 1, E), jnp.float32)
    q_emb = q_emb.at[N_SKILL].set(0.0)                          # padding_idx
    qa_emb = s * jax.random.normal(ks[1], (2 * N_SKILL + 2, E), jnp.float32)
    qa_emb = qa_emb.at[2 * N_SKILL + 1].set(0.0)                # padding_idx
    pos_emb = s * jax.random.normal(ks[2], (MAX_LEN, E), jnp.float32)

    return {
        "q_emb": q_emb,
        "qa_emb": qa_emb,
        "pos_emb": pos_emb,
        "in_w": s * jax.random.normal(ks[3], (3 * E, E), jnp.float32),
        "in_b": s * jax.random.normal(ks[4], (3 * E,), jnp.float32),
        "out_w": s * jax.random.normal(ks[5], (E, E), jnp.float32),
        "out_b": s * jax.random.normal(ks[6], (E,), jnp.float32),
        "ln1_w": jnp.ones((E,), jnp.float32),
        "ln1_b": jnp.zeros((E,), jnp.float32),
        "fc1_w": s * jax.random.normal(ks[7], (E, E), jnp.float32),
        "fc1_b": s * jax.random.normal(ks[8], (E,), jnp.float32),
        "fc2_w": s * jax.random.normal(ks[9], (E, E), jnp.float32),
        "fc2_b": s * jax.random.normal(ks[10], (E,), jnp.float32),
        "ln2_w": jnp.ones((E,), jnp.float32),
        "ln2_b": jnp.zeros((E,), jnp.float32),
        "pred_w": s * jax.random.normal(ks[11], (1, E), jnp.float32),
        "pred_b": jnp.zeros((1,), jnp.float32),
    }


if __name__ == "__main__":
    key = jax.random.PRNGKey(0)
    k_param, k_q, k_qa = jax.random.split(key, 3)
    params = init_params(k_param)
    packed = pack_params(params, BATCH, SEQ)        # one-time packing, not per call

    q_idx = jax.random.randint(k_q, (BATCH, SEQ), 0, N_SKILL, dtype=jnp.int32)
    qa_idx = jax.random.randint(k_qa, (BATCH, SEQ), 0, 2 * N_SKILL + 1,
                                dtype=jnp.int32)

    out = jax.block_until_ready(sakt_forward(q_idx, qa_idx, packed))

    # reference check (same embedded inputs, pure JAX)
    q_emb = jnp.take(params["q_emb"], q_idx, axis=0)
    qa_emb = jnp.take(params["qa_emb"], qa_idx, axis=0) \
        + jnp.take(params["pos_emb"], jnp.arange(SEQ), axis=0)[None]
    ref = jax.block_until_ready(sakt_reference(q_emb, qa_emb, params))

    np.testing.assert_allclose(np.asarray(out), np.asarray(ref),
                               rtol=2e-3, atol=2e-3)
    assert out.shape == (BATCH, SEQ)
    print("KERNEL_OK")
</pallas_src>

<mosaic_0001>
module attributes {stable_mosaic.version = 11 : i64} {
  func.func @kernel(%arg0: memref<32x32xf32, #tpu.memory_space<vmem>>, %arg1: memref<336x32xf32, #tpu.memory_space<vmem>>, %arg2: memref<1x16xf32, #tpu.memory_space<vmem>>) attributes {dimension_semantics = [], scalar_prefetch = 0 : i64, scratch_operands = 0 : i64, tpu.core_type = #tpu.core_type<tc>} {
    %c0 = arith.constant 0 : index
    %c0_0 = arith.constant 0 : index
    %0 = vector.load %arg0[%c0, %c0_0] : memref<32x32xf32, #tpu.memory_space<vmem>>, vector<16x32xf32>
    %c16 = arith.constant 16 : index
    %c0_1 = arith.constant 0 : index
    %1 = vector.load %arg0[%c16, %c0_1] : memref<32x32xf32, #tpu.memory_space<vmem>>, vector<16x32xf32>
    %c0_2 = arith.constant 0 : index
    %c0_3 = arith.constant 0 : index
    %2 = vector.load %arg1[%c0_2, %c0_3] : memref<336x32xf32, #tpu.memory_space<vmem>>, vector<32x32xf32>
    %cst = arith.constant dense<0.000000e+00> : vector<16x32xf32>
    %3 = tpu.matmul %0, %2, %cst {dimension_numbers = #tpu.dot_dimension_numbers<[1], [1], [0], [0], [0, 0, 1, 0], [], []>} : vector<16x32xf32>, vector<32x32xf32>, vector<16x32xf32> -> vector<16x32xf32>
    %c192 = arith.constant 192 : index
    %c0_4 = arith.constant 0 : index
    %4 = vector.load %arg1[%c192, %c0_4] : memref<336x32xf32, #tpu.memory_space<vmem>>, vector<1x32xf32>
    %5 = vector.broadcast %4 : vector<1x32xf32> to vector<16x32xf32>
    %6 = arith.addf %3, %5 : vector<16x32xf32>
    %c32 = arith.constant 32 : index
    %c0_5 = arith.constant 0 : index
    %7 = vector.load %arg1[%c32, %c0_5] : memref<336x32xf32, #tpu.memory_space<vmem>>, vector<64x32xf32>
    %cst_6 = arith.constant dense<0.000000e+00> : vector<16x64xf32>
    %8 = tpu.matmul %1, %7, %cst_6 {dimension_numbers = #tpu.dot_dimension_numbers<[1], [1], [0], [0], [0, 0, 1, 0], [], []>} : vector<16x32xf32>, vector<64x32xf32>, vector<16x64xf32> -> vector<16x64xf32>
    %9 = vector.extract_strided_slice %8 {offsets = [0, 0], sizes = [16, 32], strides = [1, 1]} : vector<16x64xf32> to vector<16x32xf32>
    %c193 = arith.constant 193 : index
    %c0_7 = arith.constant 0 : index
    %10 = vector.load %arg1[%c193, %c0_7] : memref<336x32xf32, #tpu.memory_space<vmem>>, vector<1x32xf32>
    %11 = vector.broadcast %10 : vector<1x32xf32> to vector<16x32xf32>
    %12 = arith.addf %9, %11 : vector<16x32xf32>
    %13 = vector.extract_strided_slice %8 {offsets = [0, 32], sizes = [16, 32], strides = [1, 1]} : vector<16x64xf32> to vector<16x32xf32>
    %c194 = arith.constant 194 : index
    %c0_8 = arith.constant 0 : index
    %14 = vector.load %arg1[%c194, %c0_8] : memref<336x32xf32, #tpu.memory_space<vmem>>, vector<1x32xf32>
    %15 = vector.broadcast %14 : vector<1x32xf32> to vector<16x32xf32>
    %16 = arith.addf %13, %15 : vector<16x32xf32>
    %c208 = arith.constant 208 : index
    %c0_9 = arith.constant 0 : index
    %17 = vector.load %arg1[%c208, %c0_9] : memref<336x32xf32, #tpu.memory_space<vmem>>, vector<64x32xf32>
    %c272 = arith.constant 272 : index
    %c0_10 = arith.constant 0 : index
    %18 = vector.load %arg1[%c272, %c0_10] : memref<336x32xf32, #tpu.memory_space<vmem>>, vector<64x16xf32>
    %19 = tpu.concatenate %6, %6, %6, %6 in 0 : vector<16x32xf32>, vector<16x32xf32>, vector<16x32xf32>, vector<16x32xf32> -> vector<64x32xf32>
    %20 = arith.mulf %19, %17 : vector<64x32xf32>
    %cst_11 = arith.constant dense<0.000000e+00> : vector<64x16xf32>
    %21 = tpu.matmul %20, %12, %cst_11 {dimension_numbers = #tpu.dot_dimension_numbers<[1], [1], [0], [0], [0, 0, 1, 0], [], []>} : vector<64x32xf32>, vector<16x32xf32>, vector<64x16xf32> -> vector<64x16xf32>
    %22 = arith.addf %21, %18 : vector<64x16xf32>
    %cst_12 = arith.constant dense<0xFF800000> : vector<64xf32>
    %23 = vector.multi_reduction <maximumf>, %22, %cst_12 [1] : vector<64x16xf32> to vector<64xf32>
    %24 = vector.shape_cast %23 : vector<64xf32> to vector<64x1xf32>
    %25 = vector.broadcast %24 : vector<64x1xf32> to vector<64x16xf32>
    %26 = arith.subf %22, %25 : vector<64x16xf32>
    %27 = math.exp %26 : vector<64x16xf32>
    %cst_13 = arith.constant dense<0.000000e+00> : vector<64xf32>
    %28 = vector.multi_reduction <add>, %27, %cst_13 [1] : vector<64x16xf32> to vector<64xf32>
    %29 = vector.shape_cast %28 : vector<64xf32> to vector<64x1xf32>
    %30 = tpu.reciprocal %29 {approx = true} : vector<64x1xf32> -> vector<64x1xf32>
    %31 = vector.broadcast %30 : vector<64x1xf32> to vector<64x16xf32>
    %32 = arith.mulf %27, %31 : vector<64x16xf32>
    %cst_14 = arith.constant dense<0.000000e+00> : vector<64x32xf32>
    %33 = tpu.matmul %32, %16, %cst_14 {dimension_numbers = #tpu.dot_dimension_numbers<[1], [0], [0], [1], [0, 0, 1, 1], [], []>} : vector<64x16xf32>, vector<16x32xf32>, vector<64x32xf32> -> vector<64x32xf32>
    %34 = arith.mulf %33, %17 : vector<64x32xf32>
    %35 = vector.extract_strided_slice %34 {offsets = [0, 0], sizes = [16, 32], strides = [1, 1]} : vector<64x32xf32> to vector<16x32xf32>
    %36 = vector.extract_strided_slice %34 {offsets = [16, 0], sizes = [16, 32], strides = [1, 1]} : vector<64x32xf32> to vector<16x32xf32>
    %37 = arith.addf %35, %36 : vector<16x32xf32>
    %38 = vector.extract_strided_slice %34 {offsets = [32, 0], sizes = [16, 32], strides = [1, 1]} : vector<64x32xf32> to vector<16x32xf32>
    %39 = arith.addf %37, %38 : vector<16x32xf32>
    %40 = vector.extract_strided_slice %34 {offsets = [48, 0], sizes = [16, 32], strides = [1, 1]} : vector<64x32xf32> to vector<16x32xf32>
    %41 = arith.addf %39, %40 : vector<16x32xf32>
    %c96 = arith.constant 96 : index
    %c0_15 = arith.constant 0 : index
    %42 = vector.load %arg1[%c96, %c0_15] : memref<336x32xf32, #tpu.memory_space<vmem>>, vector<32x32xf32>
    %cst_16 = arith.constant dense<0.000000e+00> : vector<16x32xf32>
    %43 = tpu.matmul %41, %42, %cst_16 {dimension_numbers = #tpu.dot_dimension_numbers<[1], [1], [0], [0], [0, 0, 1, 0], [], []>} : vector<16x32xf32>, vector<32x32xf32>, vector<16x32xf32> -> vector<16x32xf32>
    %c195 = arith.constant 195 : index
    %c0_17 = arith.constant 0 : index
    %44 = vector.load %arg1[%c195, %c0_17] : memref<336x32xf32, #tpu.memory_space<vmem>>, vector<1x32xf32>
    %45 = vector.broadcast %44 : vector<1x32xf32> to vector<16x32xf32>
    %46 = arith.addf %43, %45 : vector<16x32xf32>
    %47 = arith.addf %46, %0 : vector<16x32xf32>
    %c196 = arith.constant 196 : index
    %c0_18 = arith.constant 0 : index
    %48 = vector.load %arg1[%c196, %c0_18] : memref<336x32xf32, #tpu.memory_space<vmem>>, vector<1x32xf32>
    %c197 = arith.constant 197 : index
    %c0_19 = arith.constant 0 : index
    %49 = vector.load %arg1[%c197, %c0_19] : memref<336x32xf32, #tpu.memory_space<vmem>>, vector<1x32xf32>
    %cst_20 = arith.constant dense<0.000000e+00> : vector<16xf32>
    %50 = vector.multi_reduction <add>, %47, %cst_20 [1] : vector<16x32xf32> to vector<16xf32>
    %51 = vector.shape_cast %50 : vector<16xf32> to vector<16x1xf32>
    %cst_21 = arith.constant 3.200000e+01 : f32
    %52 = vector.broadcast %cst_21 : f32 to vector<16x1xf32>
    %53 = arith.divf %51, %52 : vector<16x1xf32>
    %54 = vector.broadcast %53 : vector<16x1xf32> to vector<16x32xf32>
    %55 = arith.subf %47, %54 : vector<16x32xf32>
    %56 = arith.mulf %55, %55 : vector<16x32xf32>
    %cst_22 = arith.constant dense<0.000000e+00> : vector<16xf32>
    %57 = vector.multi_reduction <add>, %56, %cst_22 [1] : vector<16x32xf32> to vector<16xf32>
    %58 = vector.shape_cast %57 : vector<16xf32> to vector<16x1xf32>
    %cst_23 = arith.constant 3.200000e+01 : f32
    %59 = vector.broadcast %cst_23 : f32 to vector<16x1xf32>
    %60 = arith.divf %58, %59 : vector<16x1xf32>
    %61 = vector.broadcast %53 : vector<16x1xf32> to vector<16x32xf32>
    %62 = arith.subf %47, %61 : vector<16x32xf32>
    %cst_24 = arith.constant 9.99999974E-6 : f32
    %63 = vector.broadcast %cst_24 : f32 to vector<16x1xf32>
    %64 = arith.addf %60, %63 : vector<16x1xf32>
    %65 = math.rsqrt %64 : vector<16x1xf32>
    %66 = vector.broadcast %65 : vector<16x1xf32> to vector<16x32xf32>
    %67 = arith.mulf %62, %66 : vector<16x32xf32>
    %68 = vector.broadcast %48 : vector<1x32xf32> to vector<16x32xf32>
    %69 = arith.mulf %67, %68 : vector<16x32xf32>
    %70 = vector.broadcast %49 : vector<1x32xf32> to vector<16x32xf32>
    %71 = arith.addf %69, %70 : vector<16x32xf32>
    %c128 = arith.constant 128 : index
    %c0_25 = arith.constant 0 : index
    %72 = vector.load %arg1[%c128, %c0_25] : memref<336x32xf32, #tpu.memory_space<vmem>>, vector<32x32xf32>
    %cst_26 = arith.constant dense<0.000000e+00> : vector<16x32xf32>
    %73 = tpu.matmul %71, %72, %cst_26 {dimension_numbers = #tpu.dot_dimension_numbers<[1], [1], [0], [0], [0, 0, 1, 0], [], []>} : vector<16x32xf32>, vector<32x32xf32>, vector<16x32xf32> -> vector<16x32xf32>
    %c198 = arith.constant 198 : index
    %c0_27 = arith.constant 0 : index
    %74 = vector.load %arg1[%c198, %c0_27] : memref<336x32xf32, #tpu.memory_space<vmem>>, vector<1x32xf32>
    %75 = vector.broadcast %74 : vector<1x32xf32> to vector<16x32xf32>
    %76 = arith.addf %73, %75 : vector<16x32xf32>
    %cst_28 = arith.constant 0.000000e+00 : f32
    %77 = vector.broadcast %cst_28 : f32 to vector<16x32xf32>
    %78 = arith.maximumf %76, %77 : vector<16x32xf32>
    %c160 = arith.constant 160 : index
    %c0_29 = arith.constant 0 : index
    %79 = vector.load %arg1[%c160, %c0_29] : memref<336x32xf32, #tpu.memory_space<vmem>>, vector<32x32xf32>
    %cst_30 = arith.constant dense<0.000000e+00> : vector<16x32xf32>
    %80 = tpu.matmul %78, %79, %cst_30 {dimension_numbers = #tpu.dot_dimension_numbers<[1], [1], [0], [0], [0, 0, 1, 0], [], []>} : vector<16x32xf32>, vector<32x32xf32>, vector<16x32xf32> -> vector<16x32xf32>
    %c199 = arith.constant 199 : index
    %c0_31 = arith.constant 0 : index
    %81 = vector.load %arg1[%c199, %c0_31] : memref<336x32xf32, #tpu.memory_space<vmem>>, vector<1x32xf32>
    %82 = vector.broadcast %81 : vector<1x32xf32> to vector<16x32xf32>
    %83 = arith.addf %80, %82 : vector<16x32xf32>
    %84 = arith.addf %83, %71 : vector<16x32xf32>
    %c200 = arith.constant 200 : index
    %c0_32 = arith.constant 0 : index
    %85 = vector.load %arg1[%c200, %c0_32] : memref<336x32xf32, #tpu.memory_space<vmem>>, vector<1x32xf32>
    %c201 = arith.constant 201 : index
    %c0_33 = arith.constant 0 : index
    %86 = vector.load %arg1[%c201, %c0_33] : memref<336x32xf32, #tpu.memory_space<vmem>>, vector<1x32xf32>
    %cst_34 = arith.constant dense<0.000000e+00> : vector<16xf32>
    %87 = vector.multi_reduction <add>, %84, %cst_34 [1] : vector<16x32xf32> to vector<16xf32>
    %88 = vector.shape_cast %87 : vector<16xf32> to vector<16x1xf32>
    %cst_35 = arith.constant 3.200000e+01 : f32
    %89 = vector.broadcast %cst_35 : f32 to vector<16x1xf32>
    %90 = arith.divf %88, %89 : vector<16x1xf32>
    %91 = vector.broadcast %90 : vector<16x1xf32> to vector<16x32xf32>
    %92 = arith.subf %84, %91 : vector<16x32xf32>
    %93 = arith.mulf %92, %92 : vector<16x32xf32>
    %cst_36 = arith.constant dense<0.000000e+00> : vector<16xf32>
    %94 = vector.multi_reduction <add>, %93, %cst_36 [1] : vector<16x32xf32> to vector<16xf32>
    %95 = vector.shape_cast %94 : vector<16xf32> to vector<16x1xf32>
    %cst_37 = arith.constant 3.200000e+01 : f32
    %96 = vector.broadcast %cst_37 : f32 to vector<16x1xf32>
    %97 = arith.divf %95, %96 : vector<16x1xf32>
    %98 = vector.broadcast %90 : vector<16x1xf32> to vector<16x32xf32>
    %99 = arith.subf %84, %98 : vector<16x32xf32>
    %cst_38 = arith.constant 9.99999974E-6 : f32
    %100 = vector.broadcast %cst_38 : f32 to vector<16x1xf32>
    %101 = arith.addf %97, %100 : vector<16x1xf32>
    %102 = math.rsqrt %101 : vector<16x1xf32>
    %103 = vector.broadcast %102 : vector<16x1xf32> to vector<16x32xf32>
    %104 = arith.mulf %99, %103 : vector<16x32xf32>
    %105 = vector.broadcast %85 : vector<1x32xf32> to vector<16x32xf32>
    %106 = arith.mulf %104, %105 : vector<16x32xf32>
    %107 = vector.broadcast %86 : vector<1x32xf32> to vector<16x32xf32>
    %108 = arith.addf %106, %107 : vector<16x32xf32>
    %c202 = arith.constant 202 : index
    %c0_39 = arith.constant 0 : index
    %109 = vector.load %arg1[%c202, %c0_39] : memref<336x32xf32, #tpu.memory_space<vmem>>, vector<1x32xf32>
    %cst_40 = arith.constant dense<0.000000e+00> : vector<1x16xf32>
    %110 = tpu.matmul %109, %108, %cst_40 {dimension_numbers = #tpu.dot_dimension_numbers<[1], [1], [0], [0], [0, 0, 1, 0], [], []>} : vector<1x32xf32>, vector<16x32xf32>, vector<1x16xf32> -> vector<1x16xf32>
    %c203 = arith.constant 203 : index
    %c0_41 = arith.constant 0 : index
    %111 = vector.load %arg1[%c203, %c0_41] : memref<336x32xf32, #tpu.memory_space<vmem>>, vector<1x1xf32>
    %112 = vector.broadcast %111 : vector<1x1xf32> to vector<1x16xf32>
    %113 = arith.addf %110, %112 : vector<1x16xf32>
    %114 = arith.negf %113 : vector<1x16xf32>
    %115 = math.exp %114 : vector<1x16xf32>
    %cst_42 = arith.constant 1.000000e+00 : f32
    %116 = vector.broadcast %cst_42 : f32 to vector<1x16xf32>
    %117 = arith.addf %116, %115 : vector<1x16xf32>
    %118 = arith.divf %116, %117 : vector<1x16xf32>
    %c0_43 = arith.constant 0 : index
    %c0_44 = arith.constant 0 : index
    %119 = vector.load %arg2[%c0_43, %c0_44] : memref<1x16xf32, #tpu.memory_space<vmem>>, vector<1x16xf32>
    tpu.vector_store %arg2[%c0_43, %c0_44], %118 {strides = array<i32>} : memref<1x16xf32, #tpu.memory_space<vmem>>, vector<1x16xf32>,
    return
  }
}

</mosaic_0001>

<llo_original>
// kernel: sakt_forward.1
$region0: #{sakt_forward.1}
  #allocation0 [shape = 'u32[]', space=smem, size = 0x4, offset = 0x4, fixed_abs, tag = 'smem constant byte address 0x4 - core index']
  #allocation1 [shape = 'u32[144,128]{1,0:T(1,128)}', space=vmem, size = 0x12000, scoped, tag = 'internal scratch']
  %s0 = inlined_call_operand.vmem [shape: f32[32,32], index: 0, kind: input, shape index: {}]
  %s1 = inlined_call_operand.vmem [shape: f32[336,32], index: 1, kind: input, shape index: {}]
  %s2 = inlined_call_operand.vmem [shape: f32[1,16], index: 2, kind: output, shape index: {}]
  %s3 = sld [smem:[#allocation0]]
  $region18: #{sakt_forward.1} parent=0
    _
  %s5 = ssub.s32 1, %s3
  %s6 = scalar_select 0, %s5, %s3
  // Predicated region
  $region2: #{sakt_forward.1} parent=0 // pred_check
    _
  $region3: #{sakt_forward.1} parent=0 // pred_check_branch
    %8 = sbr.rel (0) target = $region5
  $region4: #{sakt_forward.1} parent=0 // pred_region
    _
  $region5: #{sakt_forward.1} parent=0 // pred_fallthru
    _
  // Predicated region
  $region6: #{sakt_forward.1} parent=0 // pred_check
    _
  $region7: #{sakt_forward.1} parent=0 // pred_check_branch
    %10 = sbr.rel (0) target = $region9
  $region8: #{sakt_forward.1} parent=0 // pred_region
    _
  $region9: #{sakt_forward.1} parent=0 // pred_fallthru
    _
  %v11 = vld [vmem:[%s0] sm:$0xff]
  %v12 = vld [vmem:[%s0 + $0x8] sm:$0xff]
  %v13 = vld [vmem:[%s0 + $0x10] sm:$0xff]
  %v14 = vld [vmem:[%s0 + $0x18] sm:$0xff]
  %v15 = vld [vmem:[%s1] sm:$0xff]
  %v16 = vld [vmem:[%s1 + $0x8] sm:$0xff]
  %v17 = vld [vmem:[%s1 + $0x10] sm:$0xff]
  %v18 = vld [vmem:[%s1 + $0x18] sm:$0xff]
  %v19 = vld [vmem:[%s1 + $0xc0] sm:$0x1]
  %v20 = vlaneseq
  %v21 = vshrl.u32 %v20, 7
  %v22 = vsub.s32 0, %v21
  %v23 = vrot.slane %v19, %v22
  %vm24 = vcmask 261120
  %v26 = vsel %vm24, %v11, 0
  %v29 = vsel %vm24, %v12, 0
  %v32 = vsel %vm24, %v15, 0
  %v35 = vsel %vm24, %v16, 0
  %v38 = vsel %vm24, %v17, 0
  %v41 = vsel %vm24, %v18, 0
  %43 = vmatprep.subr.mxu0 0.0
  %44 = vmatpush1.xpose.msra.mxu0 %v32
  %45 = vmatprep.subr.mxu0 0.0
  %46 = vmatpush1.xpose.msra.mxu0 %v35
  %47 = vmatprep.subr.mxu0 0.0
  %48 = vmatpush1.xpose.msra.mxu0 %v38
  %49 = vmatprep.subr.mxu0 0.0
  %50 = vmatpush1.xpose.msra.mxu0 %v41
  %51 = vmatprep.subr.mxu0 0.0
  %52 = vmatpush1.xpose.msra.mxu0 0.0
  %53 = vmatprep.subr.mxu0 0.0
  %54 = vmatpush1.xpose.msra.mxu0 0.0
  %55 = vmatprep.subr.mxu0 0.0
  %56 = vmatpush1.xpose.msra.mxu0 0.0
  %57 = vmatprep.subr.mxu0 0.0
  %58 = vmatpush1.xpose.msra.mxu0 0.0
  %59 = vmatprep.subr.mxu0 0.0
  %60 = vmatpush1.xpose.msra.mxu0 0.0
  %61 = vmatprep.subr.mxu0 0.0
  %62 = vmatpush1.xpose.msra.mxu0 0.0
  %63 = vmatprep.subr.mxu0 0.0
  %64 = vmatpush1.xpose.msra.mxu0 0.0
  %65 = vmatprep.subr.mxu0 0.0
  %66 = vmatpush1.xpose.msra.mxu0 0.0
  %67 = vmatprep.subr.mxu0 0.0
  %68 = vmatpush1.xpose.msra.mxu0 0.0
  %69 = vmatprep.subr.mxu0 0.0
  %70 = vmatpush1.xpose.msra.mxu0 0.0
  %71 = vmatprep.subr.mxu0 0.0
  %72 = vmatpush1.xpose.msra.mxu0 0.0
  %73 = vmatprep.subr.mxu0 0.0
  %74 = vmatpush1.xpose.msra.mxu0 0.0
  %75 = vmatprep.subr.mxu0 0.0
  %76 = vmatpush1.xpose.msra.mxu0 0.0
  %77 = vmatprep.subr.mxu0 0.0
  %78 = vmatpush1.xpose.msra.mxu0 0.0
  %79 = vmatprep.subr.mxu0 0.0
  %80 = vmatpush1.xpose.msra.mxu0 0.0
  %81 = vmatprep.subr.mxu0 0.0
  %82 = vmatpush1.xpose.msra.mxu0 0.0
  %83 = vmatprep.subr.mxu0 0.0
  %84 = vmatpush1.xpose.msra.mxu0 0.0
  %85 = vmatprep.subr.mxu0 0.0
  %86 = vmatpush1.xpose.msra.mxu0 0.0
  %87 = vmatprep.subr.mxu0 0.0
  %88 = vmatpush1.xpose.msra.mxu0 0.0
  %89 = vmatprep.subr.mxu0 0.0
  %90 = vmatpush1.xpose.msra.mxu0 0.0
  %91 = vmatprep.subr.mxu0 0.0
  %92 = vmatpush1.xpose.msra.mxu0 0.0
  %93 = vmatprep.subr.mxu0 0.0
  %94 = vmatpush1.xpose.msra.mxu0 0.0
  %95 = vmatprep.subr.mxu0 0.0
  %96 = vmatpush1.xpose.msra.mxu0 0.0
  %97 = vmatprep.subr.mxu0 0.0
  %98 = vmatpush1.xpose.msra.mxu0 0.0
  %99 = vmatprep.subr.mxu0 0.0
  %100 = vmatpush1.xpose.msra.mxu0 0.0
  %101 = vmatprep.subr.mxu0 0.0
  %102 = vmatpush1.xpose.msra.mxu0 0.0
  %103 = vmatprep.subr.mxu0 0.0
  %104 = vmatpush1.xpose.msra.mxu0 0.0
  %105 = vmatprep.subr.mxu0 0.0
  %106 = vmatpush1.xpose.msra.mxu0 0.0
  %107 = vmatprep.mubr.f32.mxu0 0.0
  %108 = vmatmul.mubr.f32.gmra.mrb[0].mxu0 %v26
  %v109 = vpop.f32.mrb[0].mxu0
  %v110 = vadd.f32 %v23, %v109
  %v111 = vpop.f32.mrb[0].mxu0
  %112 = vmatprep.mubr.f32.mxu0 0.0
  %113 = vmatmul.mubr.f32.gmra.mrb[0].mxu0 %v29
  %v114 = vpop.f32.mrb[0].mxu0
  %v115 = vadd.f32 %v23, %v114
  %v116 = vpop.f32.mrb[0].mxu0
  %117 = vdwg.mxu0
  %v118 = vld [vmem:[%s1 + $0x20] sm:$0xff]
  %v119 = vld [vmem:[%s1 + $0x28] sm:$0xff]
  %v120 = vld [vmem:[%s1 + $0x30] sm:$0xff]
  %v121 = vld [vmem:[%s1 + $0x38] sm:$0xff]
  %v122 = vld [vmem:[%s1 + $0x40] sm:$0xff]
  %v123 = vld [vmem:[%s1 + $0x48] sm:$0xff]
  %v124 = vld [vmem:[%s1 + $0x50] sm:$0xff]
  %v125 = vld [vmem:[%s1 + $0x58] sm:$0xff]
  %v127 = vsel %vm24, %v13, 0
  %v130 = vsel %vm24, %v14, 0
  %v133 = vsel %vm24, %v118, 0
  %v136 = vsel %vm24, %v119, 0
  %v139 = vsel %vm24, %v120, 0
  %v142 = vsel %vm24, %v121, 0
  %v145 = vsel %vm24, %v122, 0
  %v148 = vsel %vm24, %v123, 0
  %v151 = vsel %vm24, %v124, 0
  %v154 = vsel %vm24, %v125, 0
  %156 = vmatprep.subr.mxu0 0.0
  %157 = vmatpush1.xpose.msra.mxu0 %v133
  %158 = vmatprep.subr.mxu0 0.0
  %159 = vmatpush1.xpose.msra.mxu0 %v136
  %160 = vmatprep.subr.mxu0 0.0
  %161 = vmatpush1.xpose.msra.mxu0 %v139
  %162 = vmatprep.subr.mxu0 0.0
  %163 = vmatpush1.xpose.msra.mxu0 %v142
  %164 = vmatprep.subr.mxu0 0.0
  %165 = vmatpush1.xpose.msra.mxu0 %v145
  %166 = vmatprep.subr.mxu0 0.0
  %167 = vmatpush1.xpose.msra.mxu0 %v148
  %168 = vmatprep.subr.mxu0 0.0
  %169 = vmatpush1.xpose.msra.mxu0 %v151
  %170 = vmatprep.subr.mxu0 0.0
  %171 = vmatpush1.xpose.msra.mxu0 %v154
  %172 = vmatprep.subr.mxu0 0.0
  %173 = vmatpush1.xpose.msra.mxu0 0.0
  %174 = vmatprep.subr.mxu0 0.0
  %175 = vmatpush1.xpose.msra.mxu0 0.0
  %176 = vmatprep.subr.mxu0 0.0
  %177 = vmatpush1.xpose.msra.mxu0 0.0
  %178 = vmatprep.subr.mxu0 0.0
  %179 = vmatpush1.xpose.msra.mxu0 0.0
  %180 = vmatprep.subr.mxu0 0.0
  %181 = vmatpush1.xpose.msra.mxu0 0.0
  %182 = vmatprep.subr.mxu0 0.0
  %183 = vmatpush1.xpose.msra.mxu0 0.0
  %184 = vmatprep.subr.mxu0 0.0
  %185 = vmatpush1.xpose.msra.mxu0 0.0
  %186 = vmatprep.subr.mxu0 0.0
  %187 = vmatpush1.xpose.msra.mxu0 0.0
  %188 = vmatprep.subr.mxu0 0.0
  %189 = vmatpush1.xpose.msra.mxu0 0.0
  %190 = vmatprep.subr.mxu0 0.0
  %191 = vmatpush1.xpose.msra.mxu0 0.0
  %192 = vmatprep.subr.mxu0 0.0
  %193 = vmatpush1.xpose.msra.mxu0 0.0
  %194 = vmatprep.subr.mxu0 0.0
  %195 = vmatpush1.xpose.msra.mxu0 0.0
  %196 = vmatprep.subr.mxu0 0.0
  %197 = vmatpush1.xpose.msra.mxu0 0.0
  %198 = vmatprep.subr.mxu0 0.0
  %199 = vmatpush1.xpose.msra.mxu0 0.0
  %200 = vmatprep.subr.mxu0 0.0
  %201 = vmatpush1.xpose.msra.mxu0 0.0
  %202 = vmatprep.subr.mxu0 0.0
  %203 = vmatpush1.xpose.msra.mxu0 0.0
  %204 = vmatprep.subr.mxu0 0.0
  %205 = vmatpush1.xpose.msra.mxu0 0.0
  %206 = vmatprep.subr.mxu0 0.0
  %207 = vmatpush1.xpose.msra.mxu0 0.0
  %208 = vmatprep.subr.mxu0 0.0
  %209 = vmatpush1.xpose.msra.mxu0 0.0
  %210 = vmatprep.subr.mxu0 0.0
  %211 = vmatpush1.xpose.msra.mxu0 0.0
  %212 = vmatprep.subr.mxu0 0.0
  %213 = vmatpush1.xpose.msra.mxu0 0.0
  %214 = vmatprep.subr.mxu0 0.0
  %215 = vmatpush1.xpose.msra.mxu0 0.0
  %216 = vmatprep.subr.mxu0 0.0
  %217 = vmatpush1.xpose.msra.mxu0 0.0
  %218 = vmatprep.subr.mxu0 0.0
  %219 = vmatpush1.xpose.msra.mxu0 0.0
  %220 = vmatprep.mubr.f32.mxu0 0.0
  %221 = vmatmul.mubr.f32.gmra.mrb[0].mxu0 %v127
  %v222 = vpop.f32.mrb[0].mxu0
  %v223 = vadd.f32 0.0, %v222
  %v224 = vpop.f32.mrb[0].mxu0
  %225 = vmatprep.mubr.f32.mxu0 0.0
  %226 = vmatmul.mubr.f32.gmra.mrb[0].mxu0 %v130
  %v227 = vpop.f32.mrb[0].mxu0
  %v228 = vadd.f32 0.0, %v227
  %v229 = vpop.f32.mrb[0].mxu0
  %230 = vdwg.mxu0
  %v231 = vld [vmem:[%s1 + $0xc1] sm:$0x1]
  %v232 = vlaneseq
  %v233 = vshrl.u32 %v232, 7
  %v234 = vsub.s32 0, %v233
  %v235 = vrot.slane %v231, %v234
  %v236 = vadd.f32 %v223, %v235
  %v237 = vadd.f32 %v228, %v235
  %v238 = vld [vmem:[%s1 + $0xc2] sm:$0x1]
  %v239 = vlaneseq
  %v240 = vshrl.u32 %v239, 7
  %v241 = vsub.s32 0, %v240
  %v242 = vrot.slane %v238, %v241
  %244 = vrot.lane.b32.xlu0 %v242, 32
  %v245 = vpop.permute.xlu0 %244
  %v247 = vadd.f32 %v223, %v245
  %v248 = vadd.f32 %v228, %v245
  %v249 = vld [vmem:[%s1 + $0xd0] sm:$0xff]
  %v250 = vld [vmem:[%s1 + $0xd8] sm:$0xff]
  %v251 = vld [vmem:[%s1 + $0xe0] sm:$0xff]
  %v252 = vld [vmem:[%s1 + $0xe8] sm:$0xff]
  %v253 = vld [vmem:[%s1 + $0xf0] sm:$0xff]
  %v254 = vld [vmem:[%s1 + $0xf8] sm:$0xff]
  %v255 = vld [vmem:[%s1 + $0x100] sm:$0xff]
  %v256 = vld [vmem:[%s1 + $0x108] sm:$0xff]
  %v257 = vld [vmem:[%s1 + $0x110] sm:$0xff]
  %v258 = vld [vmem:[%s1 + $0x118] sm:$0xff]
  %v259 = vld [vmem:[%s1 + $0x120] sm:$0xff]
  %v260 = vld [vmem:[%s1 + $0x128] sm:$0xff]
  %v261 = vld [vmem:[%s1 + $0x130] sm:$0xff]
  %v262 = vld [vmem:[%s1 + $0x138] sm:$0xff]
  %v263 = vld [vmem:[%s1 + $0x140] sm:$0xff]
  %v264 = vld [vmem:[%s1 + $0x148] sm:$0xff]
  %v265 = vmul.f32 %v110, %v249
  %v266 = vmul.f32 %v115, %v250
  %v267 = vmul.f32 %v110, %v251
  %v268 = vmul.f32 %v115, %v252
  %v269 = vmul.f32 %v110, %v253
  %v270 = vmul.f32 %v115, %v254
  %v271 = vmul.f32 %v110, %v255
  %v272 = vmul.f32 %v115, %v256
  %v274 = vsel %vm24, %v265, 0
  %v277 = vsel %vm24, %v266, 0
  %v280 = vsel %vm24, %v267, 0
  %v283 = vsel %vm24, %v268, 0
  %v286 = vsel %vm24, %v269, 0
  %v289 = vsel %vm24, %v270, 0
  %v292 = vsel %vm24, %v271, 0
  %v295 = vsel %vm24, %v272, 0
  %v298 = vsel %vm24, %v236, 0
  %v301 = vsel %vm24, %v237, 0
  %303 = vmatprep.subr.mxu0 0.0
  %304 = vmatpush1.xpose.msra.mxu0 %v298
  %305 = vmatprep.subr.mxu0 0.0
  %306 = vmatpush1.xpose.msra.mxu0 %v301
  %307 = vmatprep.subr.mxu0 0.0
  %308 = vmatpush1.xpose.msra.mxu0 0.0
  %309 = vmatprep.subr.mxu0 0.0
  %310 = vmatpush1.xpose.msra.mxu0 0.0
  %311 = vmatprep.subr.mxu0 0.0
  %312 = vmatpush1.xpose.msra.mxu0 0.0
  %313 = vmatprep.subr.mxu0 0.0
  %314 = vmatpush1.xpose.msra.mxu0 0.0
  %315 = vmatprep.subr.mxu0 0.0
  %316 = vmatpush1.xpose.msra.mxu0 0.0
  %317 = vmatprep.subr.mxu0 0.0
  %318 = vmatpush1.xpose.msra.mxu0 0.0
  %319 = vmatprep.subr.mxu0 0.0
  %320 = vmatpush1.xpose.msra.mxu0 0.0
  %321 = vmatprep.subr.mxu0 0.0
  %322 = vmatpush1.xpose.msra.mxu0 0.0
  %323 = vmatprep.subr.mxu0 0.0
  %324 = vmatpush1.xpose.msra.mxu0 0.0
  %325 = vmatprep.subr.mxu0 0.0
  %326 = vmatpush1.xpose.msra.mxu0 0.0
  %327 = vmatprep.subr.mxu0 0.0
  %328 = vmatpush1.xpose.msra.mxu0 0.0
  %329 = vmatprep.subr.mxu0 0.0
  %330 = vmatpush1.xpose.msra.mxu0 0.0
  %331 = vmatprep.subr.mxu0 0.0
  %332 = vmatpush1.xpose.msra.mxu0 0.0
  %333 = vmatprep.subr.mxu0 0.0
  %334 = vmatpush1.xpose.msra.mxu0 0.0
  %335 = vmatprep.subr.mxu0 0.0
  %336 = vmatpush1.xpose.msra.mxu0 0.0
  %337 = vmatprep.subr.mxu0 0.0
  %338 = vmatpush1.xpose.msra.mxu0 0.0
  %339 = vmatprep.subr.mxu0 0.0
  %340 = vmatpush1.xpose.msra.mxu0 0.0
  %341 = vmatprep.subr.mxu0 0.0
  %342 = vmatpush1.xpose.msra.mxu0 0.0
  %343 = vmatprep.subr.mxu0 0.0
  %344 = vmatpush1.xpose.msra.mxu0 0.0
  %345 = vmatprep.subr.mxu0 0.0
  %346 = vmatpush1.xpose.msra.mxu0 0.0
  %347 = vmatprep.subr.mxu0 0.0
  %348 = vmatpush1.xpose.msra.mxu0 0.0
  %349 = vmatprep.subr.mxu0 0.0
  %350 = vmatpush1.xpose.msra.mxu0 0.0
  %351 = vmatprep.subr.mxu0 0.0
  %352 = vmatpush1.xpose.msra.mxu0 0.0
  %353 = vmatprep.subr.mxu0 0.0
  %354 = vmatpush1.xpose.msra.mxu0 0.0
  %355 = vmatprep.subr.mxu0 0.0
  %356 = vmatpush1.xpose.msra.mxu0 0.0
  %357 = vmatprep.subr.mxu0 0.0
  %358 = vmatpush1.xpose.msra.mxu0 0.0
  %359 = vmatprep.subr.mxu0 0.0
  %360 = vmatpush1.xpose.msra.mxu0 0.0
  %361 = vmatprep.subr.mxu0 0.0
  %362 = vmatpush1.xpose.msra.mxu0 0.0
  %363 = vmatprep.subr.mxu0 0.0
  %364 = vmatpush1.xpose.msra.mxu0 0.0
  %365 = vmatprep.subr.mxu0 0.0
  %366 = vmatpush1.xpose.msra.mxu0 0.0
  %367 = vmatprep.mubr.f32.mxu0 0.0
  %368 = vmatmul.mubr.f32.gmra.mrb[0].mxu0 %v274
  %v369 = vpop.f32.mrb[0].mxu0
  %v370 = vadd.f32 %v257, %v369
  %v371 = vpop.f32.mrb[0].mxu0
  %372 = vmatprep.mubr.f32.mxu0 0.0
  %373 = vmatmul.mubr.f32.gmra.mrb[0].mxu0 %v277
  %v374 = vpop.f32.mrb[0].mxu0
  %v375 = vadd.f32 %v258, %v374
  %v376 = vpop.f32.mrb[0].mxu0
  %377 = vmatprep.mubr.f32.mxu0 0.0
  %378 = vmatmul.mubr.f32.gmra.mrb[0].mxu0 %v280
  %v379 = vpop.f32.mrb[0].mxu0
  %v380 = vadd.f32 %v259, %v379
  %v381 = vpop.f32.mrb[0].mxu0
  %382 = vmatprep.mubr.f32.mxu0 0.0
  %383 = vmatmul.mubr.f32.gmra.mrb[0].mxu0 %v283
  %v384 = vpop.f32.mrb[0].mxu0
  %v385 = vadd.f32 %v260, %v384
  %v386 = vpop.f32.mrb[0].mxu0
  %387 = vmatprep.mubr.f32.mxu0 0.0
  %388 = vmatmul.mubr.f32.gmra.mrb[0].mxu0 %v286
  %v389 = vpop.f32.mrb[0].mxu0
  %v390 = vadd.f32 %v261, %v389
  %v391 = vpop.f32.mrb[0].mxu0
  %392 = vmatprep.mubr.f32.mxu0 0.0
  %393 = vmatmul.mubr.f32.gmra.mrb[0].mxu0 %v289
  %v394 = vpop.f32.mrb[0].mxu0
  %v395 = vadd.f32 %v262, %v394
  %v396 = vpop.f32.mrb[0].mxu0
  %397 = vmatprep.mubr.f32.mxu0 0.0
  %398 = vmatmul.mubr.f32.gmra.mrb[0].mxu0 %v292
  %v399 = vpop.f32.mrb[0].mxu0
  %v400 = vadd.f32 %v263, %v399
  %v401 = vpop.f32.mrb[0].mxu0
  %402 = vmatprep.mubr.f32.mxu0 0.0
  %403 = vmatmul.mubr.f32.gmra.mrb[0].mxu0 %v295
  %v404 = vpop.f32.mrb[0].mxu0
  %v405 = vadd.f32 %v264, %v404
  %v406 = vpop.f32.mrb[0].mxu0
  %407 = vdwg.mxu0
  %vm408 = vcmask 130048
  %v409 = vsel %vm408, %v370, -inf
  %410 = vmax.xlane.f32.xlu0 %v409
  %v411 = vpop.xlane.xlu0 %410
  %v412 = vsel %vm408, %v375, -inf
  %413 = vmax.xlane.f32.xlu0 %v412
  %v414 = vpop.xlane.xlu0 %413
  %v415 = vsel %vm408, %v380, -inf
  %416 = vmax.xlane.f32.xlu0 %v415
  %v417 = vpop.xlane.xlu0 %416
  %v418 = vsel %vm408, %v385, -inf
  %419 = vmax.xlane.f32.xlu0 %v418
  %v420 = vpop.xlane.xlu0 %419
  %v421 = vsel %vm408, %v390, -inf
  %422 = vmax.xlane.f32.xlu0 %v421
  %v423 = vpop.xlane.xlu0 %422
  %v424 = vsel %vm408, %v395, -inf
  %425 = vmax.xlane.f32.xlu0 %v424
  %v426 = vpop.xlane.xlu0 %425
  %v427 = vsel %vm408, %v400, -inf
  %428 = vmax.xlane.f32.xlu0 %v427
  %v429 = vpop.xlane.xlu0 %428
  %v430 = vsel %vm408, %v405, -inf
  %431 = vmax.xlane.f32.xlu0 %v430
  %v432 = vpop.xlane.xlu0 %431
  %v433 = vsub.f32 %v370, %v411
  %v434 = vsub.f32 %v375, %v414
  %v435 = vsub.f32 %v380, %v417
  %v436 = vsub.f32 %v385, %v420
  %v437 = vsub.f32 %v390, %v423
  %v438 = vsub.f32 %v395, %v426
  %v439 = vsub.f32 %v400, %v429
  %v440 = vsub.f32 %v405, %v432
  %v441 = vmul.f32 %v433, 1.442695
  %v442 = vpow.pop %v441
  %v443 = vmul.f32 %v434, 1.442695
  %v444 = vpow.pop %v443
  %v445 = vmul.f32 %v435, 1.442695
  %v446 = vpow.pop %v445
  %v447 = vmul.f32 %v436, 1.442695
  %v448 = vpow.pop %v447
  %v449 = vmul.f32 %v437, 1.442695
  %v450 = vpow.pop %v449
  %v451 = vmul.f32 %v438, 1.442695
  %v452 = vpow.pop %v451
  %v453 = vmul.f32 %v439, 1.442695
  %v454 = vpow.pop %v453
  %v455 = vmul.f32 %v440, 1.442695
  %v456 = vpow.pop %v455
  %v457 = vsel %vm408, %v442, 0.0
  %458 = vadd.xlane.f32.xlu0 %v457
  %v459 = vpop.xlane.xlu0 %458
  %v460 = vsel %vm408, %v444, 0.0
  %461 = vadd.xlane.f32.xlu0 %v460
  %v462 = vpop.xlane.xlu0 %461
  %v463 = vsel %vm408, %v446, 0.0
  %464 = vadd.xlane.f32.xlu0 %v463
  %v465 = vpop.xlane.xlu0 %464
  %v466 = vsel %vm408, %v448, 0.0
  %467 = vadd.xlane.f32.xlu0 %v466
  %v468 = vpop.xlane.xlu0 %467
  %v469 = vsel %vm408, %v450, 0.0
  %470 = vadd.xlane.f32.xlu0 %v469
  %v471 = vpop.xlane.xlu0 %470
  %v472 = vsel %vm408, %v452, 0.0
  %473 = vadd.xlane.f32.xlu0 %v472
  %v474 = vpop.xlane.xlu0 %473
  %v475 = vsel %vm408, %v454, 0.0
  %476 = vadd.xlane.f32.xlu0 %v475
  %v477 = vpop.xlane.xlu0 %476
  %v478 = vsel %vm408, %v456, 0.0
  %479 = vadd.xlane.f32.xlu0 %v478
  %v480 = vpop.xlane.xlu0 %479
  %v481 = vrcp.pop %v459
  %v482 = vrcp.pop %v462
  %v483 = vrcp.pop %v465
  %v484 = vrcp.pop %v468
  %v485 = vrcp.pop %v471
  %v486 = vrcp.pop %v474
  %v487 = vrcp.pop %v477
  %v488 = vrcp.pop %v480
  %v489 = vmul.f32 %v442, %v481
  %v490 = vmul.f32 %v444, %v482
  %v491 = vmul.f32 %v446, %v483
  %v492 = vmul.f32 %v448, %v484
  %v493 = vmul.f32 %v450, %v485
  %v494 = vmul.f32 %v452, %v486
  %v495 = vmul.f32 %v454, %v487
  %v496 = vmul.f32 %v456, %v488
  %499 = vrot.lane.b32.xlu0 %v247, 96
  %v500 = vpop.permute.xlu0 %499
  %501 = vrot.lane.b32.xlu0 %v248, 96
  %v502 = vpop.permute.xlu0 %501
  %v506 = vsel %vm408, %v489, 0
  %v509 = vsel %vm408, %v490, 0
  %v512 = vsel %vm408, %v491, 0
  %v515 = vsel %vm408, %v492, 0
  %v518 = vsel %vm408, %v493, 0
  %v521 = vsel %vm408, %v494, 0
  %v524 = vsel %vm408, %v495, 0
  %v527 = vsel %vm408, %v496, 0
  %529 = vmatprep.subr.mxu0 0.0
  %530 = vmatpush1.msra.mxu0 %v500
  %531 = vmatprep.subr.mxu0 0.0
  %532 = vmatpush1.msra.mxu0 %v502
  %533 = vmatprep.subr.mxu0 0.0
  %534 = vmatpush1.msra.mxu0 0.0
  %535 = vmatprep.subr.mxu0 0.0
  %536 = vmatpush1.msra.mxu0 0.0
  %537 = vmatprep.subr.mxu0 0.0
  %538 = vmatpush1.msra.mxu0 0.0
  %539 = vmatprep.subr.mxu0 0.0
  %540 = vmatpush1.msra.mxu0 0.0
  %541 = vmatprep.subr.mxu0 0.0
  %542 = vmatpush1.msra.mxu0 0.0
  %543 = vmatprep.subr.mxu0 0.0
  %544 = vmatpush1.msra.mxu0 0.0
  %545 = vmatprep.subr.mxu0 0.0
  %546 = vmatpush1.msra.mxu0 0.0
  %547 = vmatprep.subr.mxu0 0.0
  %548 = vmatpush1.msra.mxu0 0.0
  %549 = vmatprep.subr.mxu0 0.0
  %550 = vmatpush1.msra.mxu0 0.0
  %551 = vmatprep.subr.mxu0 0.0
  %552 = vmatpush1.msra.mxu0 0.0
  %553 = vmatprep.subr.mxu0 0.0
  %554 = vmatpush1.msra.mxu0 0.0
  %555 = vmatprep.subr.mxu0 0.0
  %556 = vmatpush1.msra.mxu0 0.0
  %557 = vmatprep.subr.mxu0 0.0
  %558 = vmatpush1.msra.mxu0 0.0
  %559 = vmatprep.subr.mxu0 0.0
  %560 = vmatpush1.msra.mxu0 0.0
  %561 = vmatprep.subr.mxu0 0.0
  %562 = vmatpush1.msra.mxu0 0.0
  %563 = vmatprep.subr.mxu0 0.0
  %564 = vmatpush1.msra.mxu0 0.0
  %565 = vmatprep.subr.mxu0 0.0
  %566 = vmatpush1.msra.mxu0 0.0
  %567 = vmatprep.subr.mxu0 0.0
  %568 = vmatpush1.msra.mxu0 0.0
  %569 = vmatprep.subr.mxu0 0.0
  %570 = vmatpush1.msra.mxu0 0.0
  %571 = vmatprep.subr.mxu0 0.0
  %572 = vmatpush1.msra.mxu0 0.0
  %573 = vmatprep.subr.mxu0 0.0
  %574 = vmatpush1.msra.mxu0 0.0
  %575 = vmatprep.subr.mxu0 0.0
  %576 = vmatpush1.msra.mxu0 0.0
  %577 = vmatprep.subr.mxu0 0.0
  %578 = vmatpush1.msra.mxu0 0.0
  %579 = vmatprep.subr.mxu0 0.0
  %580 = vmatpush1.msra.mxu0 0.0
  %581 = vmatprep.subr.mxu0 0.0
  %582 = vmatpush1.msra.mxu0 0.0
  %583 = vmatprep.subr.mxu0 0.0
  %584 = vmatpush1.msra.mxu0 0.0
  %585 = vmatprep.subr.mxu0 0.0
  %586 = vmatpush1.msra.mxu0 0.0
  %587 = vmatprep.subr.mxu0 0.0
  %588 = vmatpush1.msra.mxu0 0.0
  %589 = vmatprep.subr.mxu0 0.0
  %590 = vmatpush1.msra.mxu0 0.0
  %591 = vmatprep.subr.mxu0 0.0
  %592 = vmatpush1.msra.mxu0 0.0
  %593 = vmatprep.mubr.f32.mxu0 0.0
  %594 = vmatmul.mubr.f32.gmra.mrb[0].mxu0 %v506
  %v595 = vpop.f32.mrb[0].mxu0
  %v596 = vadd.f32 0.0, %v595
  %v597 = vpop.f32.mrb[0].mxu0
  %598 = vmatprep.mubr.f32.mxu0 0.0
  %599 = vmatmul.mubr.f32.gmra.mrb[0].mxu0 %v509
  %v600 = vpop.f32.mrb[0].mxu0
  %v601 = vadd.f32 0.0, %v600
  %v602 = vpop.f32.mrb[0].mxu0
  %603 = vmatprep.mubr.f32.mxu0 0.0
  %604 = vmatmul.mubr.f32.gmra.mrb[0].mxu0 %v512
  %v605 = vpop.f32.mrb[0].mxu0
  %v606 = vadd.f32 0.0, %v605
  %v607 = vpop.f32.mrb[0].mxu0
  %608 = vmatprep.mubr.f32.mxu0 0.0
  %609 = vmatmul.mubr.f32.gmra.mrb[0].mxu0 %v515
  %v610 = vpop.f32.mrb[0].mxu0
  %v611 = vadd.f32 0.0, %v610
  %v612 = vpop.f32.mrb[0].mxu0
  %613 = vmatprep.mubr.f32.mxu0 0.0
  %614 = vmatmul.mubr.f32.gmra.mrb[0].mxu0 %v518
  %v615 = vpop.f32.mrb[0].mxu0
  %v616 = vadd.f32 0.0, %v615
  %v617 = vpop.f32.mrb[0].mxu0
  %618 = vmatprep.mubr.f32.mxu0 0.0
  %619 = vmatmul.mubr.f32.gmra.mrb[0].mxu0 %v521
  %v620 = vpop.f32.mrb[0].mxu0
  %v621 = vadd.f32 0.0, %v620
  %v622 = vpop.f32.mrb[0].mxu0
  %623 = vmatprep.mubr.f32.mxu0 0.0
  %624 = vmatmul.mubr.f32.gmra.mrb[0].mxu0 %v524
  %v625 = vpop.f32.mrb[0].mxu0
  %v626 = vadd.f32 0.0, %v625
  %v627 = vpop.f32.mrb[0].mxu0
  %628 = vmatprep.mubr.f32.mxu0 0.0
  %629 = vmatmul.mubr.f32.gmra.mrb[0].mxu0 %v527
  %v630 = vpop.f32.mrb[0].mxu0
  %v631 = vadd.f32 0.0, %v630
  %v632 = vpop.f32.mrb[0].mxu0
  %633 = vdwg.mxu0
  %v634 = vmul.f32 %v596, %v249
  %v635 = vmul.f32 %v601, %v250
  %v636 = vmul.f32 %v606, %v251
  %v637 = vmul.f32 %v611, %v252
  %v638 = vmul.f32 %v616, %v253
  %v639 = vmul.f32 %v621, %v254
  %v640 = vmul.f32 %v626, %v255
  %v641 = vmul.f32 %v631, %v256
  %v642 = vadd.f32 %v634, %v636
  %v643 = vadd.f32 %v635, %v637
  %v644 = vadd.f32 %v642, %v638
  %v645 = vadd.f32 %v643, %v639
  %v646 = vadd.f32 %v644, %v640
  %v647 = vadd.f32 %v645, %v641
  %v648 = vld [vmem:[%s1 + $0x60] sm:$0xff]
  %v649 = vld [vmem:[%s1 + $0x68] sm:$0xff]
  %v650 = vld [vmem:[%s1 + $0x70] sm:$0xff]
  %v651 = vld [vmem:[%s1 + $0x78] sm:$0xff]
  %v652 = vld [vmem:[%s1 + $0xc3] sm:$0x1]
  %v653 = vlaneseq
  %v654 = vshrl.u32 %v653, 7
  %v655 = vsub.s32 0, %v654
  %v656 = vrot.slane %v652, %v655
  %v658 = vsel %vm24, %v646, 0
  %v661 = vsel %vm24, %v647, 0
  %v664 = vsel %vm24, %v648, 0
  %v667 = vsel %vm24, %v649, 0
  %v670 = vsel %vm24, %v650, 0
  %v673 = vsel %vm24, %v651, 0
  %675 = vmatprep.subr.mxu0 0.0
  %676 = vmatpush1.xpose.msra.mxu0 %v664
  %677 = vmatprep.subr.mxu0 0.0
  %678 = vmatpush1.xpose.msra.mxu0 %v667
  %679 = vmatprep.subr.mxu0 0.0
  %680 = vmatpush1.xpose.msra.mxu0 %v670
  %681 = vmatprep.subr.mxu0 0.0
  %682 = vmatpush1.xpose.msra.mxu0 %v673
  %683 = vmatprep.subr.mxu0 0.0
  %684 = vmatpush1.xpose.msra.mxu0 0.0
  %685 = vmatprep.subr.mxu0 0.0
  %686 = vmatpush1.xpose.msra.mxu0 0.0
  %687 = vmatprep.subr.mxu0 0.0
  %688 = vmatpush1.xpose.msra.mxu0 0.0
  %689 = vmatprep.subr.mxu0 0.0
  %690 = vmatpush1.xpose.msra.mxu0 0.0
  %691 = vmatprep.subr.mxu0 0.0
  %692 = vmatpush1.xpose.msra.mxu0 0.0
  %693 = vmatprep.subr.mxu0 0.0
  %694 = vmatpush1.xpose.msra.mxu0 0.0
  %695 = vmatprep.subr.mxu0 0.0
  %696 = vmatpush1.xpose.msra.mxu0 0.0
  %697 = vmatprep.subr.mxu0 0.0
  %698 = vmatpush1.xpose.msra.mxu0 0.0
  %699 = vmatprep.subr.mxu0 0.0
  %700 = vmatpush1.xpose.msra.mxu0 0.0
  %701 = vmatprep.subr.mxu0 0.0
  %702 = vmatpush1.xpose.msra.mxu0 0.0
  %703 = vmatprep.subr.mxu0 0.0
  %704 = vmatpush1.xpose.msra.mxu0 0.0
  %705 = vmatprep.subr.mxu0 0.0
  %706 = vmatpush1.xpose.msra.mxu0 0.0
  %707 = vmatprep.subr.mxu0 0.0
  %708 = vmatpush1.xpose.msra.mxu0 0.0
  %709 = vmatprep.subr.mxu0 0.0
  %710 = vmatpush1.xpose.msra.mxu0 0.0
  %711 = vmatprep.subr.mxu0 0.0
  %712 = vmatpush1.xpose.msra.mxu0 0.0
  %713 = vmatprep.subr.mxu0 0.0
  %714 = vmatpush1.xpose.msra.mxu0 0.0
  %715 = vmatprep.subr.mxu0 0.0
  %716 = vmatpush1.xpose.msra.mxu0 0.0
  %717 = vmatprep.subr.mxu0 0.0
  %718 = vmatpush1.xpose.msra.mxu0 0.0
  %719 = vmatprep.subr.mxu0 0.0
  %720 = vmatpush1.xpose.msra.mxu0 0.0
  %721 = vmatprep.subr.mxu0 0.0
  %722 = vmatpush1.xpose.msra.mxu0 0.0
  %723 = vmatprep.subr.mxu0 0.0
  %724 = vmatpush1.xpose.msra.mxu0 0.0
  %725 = vmatprep.subr.mxu0 0.0
  %726 = vmatpush1.xpose.msra.mxu0 0.0
  %727 = vmatprep.subr.mxu0 0.0
  %728 = vmatpush1.xpose.msra.mxu0 0.0
  %729 = vmatprep.subr.mxu0 0.0
  %730 = vmatpush1.xpose.msra.mxu0 0.0
  %731 = vmatprep.subr.mxu0 0.0
  %732 = vmatpush1.xpose.msra.mxu0 0.0
  %733 = vmatprep.subr.mxu0 0.0
  %734 = vmatpush1.xpose.msra.mxu0 0.0
  %735 = vmatprep.subr.mxu0 0.0
  %736 = vmatpush1.xpose.msra.mxu0 0.0
  %737 = vmatprep.subr.mxu0 0.0
  %738 = vmatpush1.xpose.msra.mxu0 0.0
  %739 = vmatprep.mubr.f32.mxu0 0.0
  %740 = vmatmul.mubr.f32.gmra.mrb[0].mxu0 %v658
  %v741 = vpop.f32.mrb[0].mxu0
  %v742 = vadd.f32 %v656, %v741
  %v743 = vpop.f32.mrb[0].mxu0
  %744 = vmatprep.mubr.f32.mxu0 0.0
  %745 = vmatmul.mubr.f32.gmra.mrb[0].mxu0 %v661
  %v746 = vpop.f32.mrb[0].mxu0
  %v747 = vadd.f32 %v656, %v746
  %v748 = vpop.f32.mrb[0].mxu0
  %749 = vdwg.mxu0
  %v750 = vadd.f32 %v742, %v11
  %v751 = vadd.f32 %v747, %v12
  %v752 = vld [vmem:[%s1 + $0xc4] sm:$0x1]
  %v753 = vld [vmem:[%s1 + $0xc5] sm:$0x1]
  %v754 = vsel %vm24, %v750, 0.0
  %755 = vadd.xlane.f32.xlu0 %v754
  %v756 = vpop.xlane.xlu0 %755
  %v757 = vsel %vm24, %v751, 0.0
  %758 = vadd.xlane.f32.xlu0 %v757
  %v759 = vpop.xlane.xlu0 %758
  %v760 = vrcp.pop 32.0
  %v761 = vmul.f32 %v756, %v760
  %v762 = vmul.f32 %v759, %v760
  %v763 = vsub.f32 %v750, %v761
  %v764 = vsub.f32 %v751, %v762
  %v765 = vmul.f32 %v763, %v763
  %v766 = vmul.f32 %v764, %v764
  %v767 = vsel %vm24, %v765, 0.0
  %768 = vadd.xlane.f32.xlu0 %v767
  %v769 = vpop.xlane.xlu0 %768
  %v770 = vsel %vm24, %v766, 0.0
  %771 = vadd.xlane.f32.xlu0 %v770
  %v772 = vpop.xlane.xlu0 %771
  %v773 = vmul.f32 %v769, %v760
  %v774 = vmul.f32 %v772, %v760
  %v775 = vadd.f32 %v773, 1e-05
  %v776 = vadd.f32 %v774, 1e-05
  %v777 = vrsqrt.pop %v775
  %v778 = vrsqrt.pop %v776
  %v779 = vmul.f32 %v763, %v777
  %v780 = vmul.f32 %v764, %v778
  %v781 = vlaneseq
  %v782 = vshrl.u32 %v781, 7
  %v783 = vsub.s32 0, %v782
  %v784 = vrot.slane %v752, %v783
  %v785 = vmul.f32 %v779, %v784
  %v786 = vmul.f32 %v780, %v784
  %v787 = vlaneseq
  %v788 = vshrl.u32 %v787, 7
  %v789 = vsub.s32 0, %v788
  %v790 = vrot.slane %v753, %v789
  %v791 = vadd.f32 %v785, %v790
  %v792 = vadd.f32 %v786, %v790
  %v793 = vld [vmem:[%s1 + $0x80] sm:$0xff]
  %v794 = vld [vmem:[%s1 + $0x88] sm:$0xff]
  %v795 = vld [vmem:[%s1 + $0x90] sm:$0xff]
  %v796 = vld [vmem:[%s1 + $0x98] sm:$0xff]
  %v797 = vld [vmem:[%s1 + $0xc6] sm:$0x1]
  %v798 = vlaneseq
  %v799 = vshrl.u32 %v798, 7
  %v800 = vsub.s32 0, %v799
  %v801 = vrot.slane %v797, %v800
  %v803 = vsel %vm24, %v791, 0
  %v806 = vsel %vm24, %v792, 0
  %v809 = vsel %vm24, %v793, 0
  %v812 = vsel %vm24, %v794, 0
  %v815 = vsel %vm24, %v795, 0
  %v818 = vsel %vm24, %v796, 0
  %820 = vmatprep.subr.mxu0 0.0
  %821 = vmatpush1.xpose.msra.mxu0 %v809
  %822 = vmatprep.subr.mxu0 0.0
  %823 = vmatpush1.xpose.msra.mxu0 %v812
  %824 = vmatprep.subr.mxu0 0.0
  %825 = vmatpush1.xpose.msra.mxu0 %v815
  %826 = vmatprep.subr.mxu0 0.0
  %827 = vmatpush1.xpose.msra.mxu0 %v818
  %828 = vmatprep.subr.mxu0 0.0
  %829 = vmatpush1.xpose.msra.mxu0 0.0
  %830 = vmatprep.subr.mxu0 0.0
  %831 = vmatpush1.xpose.msra.mxu0 0.0
  %832 = vmatprep.subr.mxu0 0.0
  %833 = vmatpush1.xpose.msra.mxu0 0.0
  %834 = vmatprep.subr.mxu0 0.0
  %835 = vmatpush1.xpose.msra.mxu0 0.0
  %836 = vmatprep.subr.mxu0 0.0
  %837 = vmatpush1.xpose.msra.mxu0 0.0
  %838 = vmatprep.subr.mxu0 0.0
  %839 = vmatpush1.xpose.msra.mxu0 0.0
  %840 = vmatprep.subr.mxu0 0.0
  %841 = vmatpush1.xpose.msra.mxu0 0.0
  %842 = vmatprep.subr.mxu0 0.0
  %843 = vmatpush1.xpose.msra.mxu0 0.0
  %844 = vmatprep.subr.mxu0 0.0
  %845 = vmatpush1.xpose.msra.mxu0 0.0
  %846 = vmatprep.subr.mxu0 0.0
  %847 = vmatpush1.xpose.msra.mxu0 0.0
  %848 = vmatprep.subr.mxu0 0.0
  %849 = vmatpush1.xpose.msra.mxu0 0.0
  %850 = vmatprep.subr.mxu0 0.0
  %851 = vmatpush1.xpose.msra.mxu0 0.0
  %852 = vmatprep.subr.mxu0 0.0
  %853 = vmatpush1.xpose.msra.mxu0 0.0
  %854 = vmatprep.subr.mxu0 0.0
  %855 = vmatpush1.xpose.msra.mxu0 0.0
  %856 = vmatprep.subr.mxu0 0.0
  %857 = vmatpush1.xpose.msra.mxu0 0.0
  %858 = vmatprep.subr.mxu0 0.0
  %859 = vmatpush1.xpose.msra.mxu0 0.0
  %860 = vmatprep.subr.mxu0 0.0
  %861 = vmatpush1.xpose.msra.mxu0 0.0
  %862 = vmatprep.subr.mxu0 0.0
  %863 = vmatpush1.xpose.msra.mxu0 0.0
  %864 = vmatprep.subr.mxu0 0.0
  %865 = vmatpush1.xpose.msra.mxu0 0.0
  %866 = vmatprep.subr.mxu0 0.0
  %867 = vmatpush1.xpose.msra.mxu0 0.0
  %868 = vmatprep.subr.mxu0 0.0
  %869 = vmatpush1.xpose.msra.mxu0 0.0
  %870 = vmatprep.subr.mxu0 0.0
  %871 = vmatpush1.xpose.msra.mxu0 0.0
  %872 = vmatprep.subr.mxu0 0.0
  %873 = vmatpush1.xpose.msra.mxu0 0.0
  %874 = vmatprep.subr.mxu0 0.0
  %875 = vmatpush1.xpose.msra.mxu0 0.0
  %876 = vmatprep.subr.mxu0 0.0
  %877 = vmatpush1.xpose.msra.mxu0 0.0
  %878 = vmatprep.subr.mxu0 0.0
  %879 = vmatpush1.xpose.msra.mxu0 0.0
  %880 = vmatprep.subr.mxu0 0.0
  %881 = vmatpush1.xpose.msra.mxu0 0.0
  %882 = vmatprep.subr.mxu0 0.0
  %883 = vmatpush1.xpose.msra.mxu0 0.0
  %884 = vmatprep.mubr.f32.mxu0 0.0
  %885 = vmatmul.mubr.f32.gmra.mrb[0].mxu0 %v803
  %v886 = vpop.f32.mrb[0].mxu0
  %v887 = vadd.f32 %v801, %v886
  %v888 = vpop.f32.mrb[0].mxu0
  %889 = vmatprep.mubr.f32.mxu0 0.0
  %890 = vmatmul.mubr.f32.gmra.mrb[0].mxu0 %v806
  %v891 = vpop.f32.mrb[0].mxu0
  %v892 = vadd.f32 %v801, %v891
  %v893 = vpop.f32.mrb[0].mxu0
  %894 = vdwg.mxu0
  %v895 = vmax.f32 %v887, 0.0
  %v896 = vmax.f32 %v892, 0.0
  %v897 = vld [vmem:[%s1 + $0xa0] sm:$0xff]
  %v898 = vld [vmem:[%s1 + $0xa8] sm:$0xff]
  %v899 = vld [vmem:[%s1 + $0xb0] sm:$0xff]
  %v900 = vld [vmem:[%s1 + $0xb8] sm:$0xff]
  %v901 = vld [vmem:[%s1 + $0xc7] sm:$0x1]
  %v902 = vlaneseq
  %v903 = vshrl.u32 %v902, 7
  %v904 = vsub.s32 0, %v903
  %v905 = vrot.slane %v901, %v904
  %v907 = vsel %vm24, %v895, 0
  %v910 = vsel %vm24, %v896, 0
  %v913 = vsel %vm24, %v897, 0
  %v916 = vsel %vm24, %v898, 0
  %v919 = vsel %vm24, %v899, 0
  %v922 = vsel %vm24, %v900, 0
  %924 = vmatprep.subr.mxu0 0.0
  %925 = vmatpush1.xpose.msra.mxu0 %v913
  %926 = vmatprep.subr.mxu0 0.0
  %927 = vmatpush1.xpose.msra.mxu0 %v916
  %928 = vmatprep.subr.mxu0 0.0
  %929 = vmatpush1.xpose.msra.mxu0 %v919
  %930 = vmatprep.subr.mxu0 0.0
  %931 = vmatpush1.xpose.msra.mxu0 %v922
  %932 = vmatprep.subr.mxu0 0.0
  %933 = vmatpush1.xpose.msra.mxu0 0.0
  %934 = vmatprep.subr.mxu0 0.0
  %935 = vmatpush1.xpose.msra.mxu0 0.0
  %936 = vmatprep.subr.mxu0 0.0
  %937 = vmatpush1.xpose.msra.mxu0 0.0
  %938 = vmatprep.subr.mxu0 0.0
  %939 = vmatpush1.xpose.msra.mxu0 0.0
  %940 = vmatprep.subr.mxu0 0.0
  %941 = vmatpush1.xpose.msra.mxu0 0.0
  %942 = vmatprep.subr.mxu0 0.0
  %943 = vmatpush1.xpose.msra.mxu0 0.0
  %944 = vmatprep.subr.mxu0 0.0
  %945 = vmatpush1.xpose.msra.mxu0 0.0
  %946 = vmatprep.subr.mxu0 0.0
  %947 = vmatpush1.xpose.msra.mxu0 0.0
  %948 = vmatprep.subr.mxu0 0.0
  %949 = vmatpush1.xpose.msra.mxu0 0.0
  %950 = vmatprep.subr.mxu0 0.0
  %951 = vmatpush1.xpose.msra.mxu0 0.0
  %952 = vmatprep.subr.mxu0 0.0
  %953 = vmatpush1.xpose.msra.mxu0 0.0
  %954 = vmatprep.subr.mxu0 0.0
  %955 = vmatpush1.xpose.msra.mxu0 0.0
  %956 = vmatprep.subr.mxu0 0.0
  %957 = vmatpush1.xpose.msra.mxu0 0.0
  %958 = vmatprep.subr.mxu0 0.0
  %959 = vmatpush1.xpose.msra.mxu0 0.0
  %960 = vmatprep.subr.mxu0 0.0
  %961 = vmatpush1.xpose.msra.mxu0 0.0
  %962 = vmatprep.subr.mxu0 0.0
  %963 = vmatpush1.xpose.msra.mxu0 0.0
  %964 = vmatprep.subr.mxu0 0.0
  %965 = vmatpush1.xpose.msra.mxu0 0.0
  %966 = vmatprep.subr.mxu0 0.0
  %967 = vmatpush1.xpose.msra.mxu0 0.0
  %968 = vmatprep.subr.mxu0 0.0
  %969 = vmatpush1.xpose.msra.mxu0 0.0
  %970 = vmatprep.subr.mxu0 0.0
  %971 = vmatpush1.xpose.msra.mxu0 0.0
  %972 = vmatprep.subr.mxu0 0.0
  %973 = vmatpush1.xpose.msra.mxu0 0.0
  %974 = vmatprep.subr.mxu0 0.0
  %975 = vmatpush1.xpose.msra.mxu0 0.0
  %976 = vmatprep.subr.mxu0 0.0
  %977 = vmatpush1.xpose.msra.mxu0 0.0
  %978 = vmatprep.subr.mxu0 0.0
  %979 = vmatpush1.xpose.msra.mxu0 0.0
  %980 = vmatprep.subr.mxu0 0.0
  %981 = vmatpush1.xpose.msra.mxu0 0.0
  %982 = vmatprep.subr.mxu0 0.0
  %983 = vmatpush1.xpose.msra.mxu0 0.0
  %984 = vmatprep.subr.mxu0 0.0
  %985 = vmatpush1.xpose.msra.mxu0 0.0
  %986 = vmatprep.subr.mxu0 0.0
  %987 = vmatpush1.xpose.msra.mxu0 0.0
  %988 = vmatprep.mubr.f32.mxu0 0.0
  %989 = vmatmul.mubr.f32.gmra.mrb[0].mxu0 %v907
  %v990 = vpop.f32.mrb[0].mxu0
  %v991 = vadd.f32 %v905, %v990
  %v992 = vpop.f32.mrb[0].mxu0
  %993 = vmatprep.mubr.f32.mxu0 0.0
  %994 = vmatmul.mubr.f32.gmra.mrb[0].mxu0 %v910
  %v995 = vpop.f32.mrb[0].mxu0
  %v996 = vadd.f32 %v905, %v995
  %v997 = vpop.f32.mrb[0].mxu0
  %998 = vdwg.mxu0
  %v999 = vadd.f32 %v991, %v791
  %v1000 = vadd.f32 %v996, %v792
  %v1001 = vld [vmem:[%s1 + $0xc8] sm:$0x1]
  %v1002 = vld [vmem:[%s1 + $0xc9] sm:$0x1]
  %v1003 = vsel %vm24, %v999, 0.0
  %1004 = vadd.xlane.f32.xlu0 %v1003
  %v1005 = vpop.xlane.xlu0 %1004
  %v1006 = vsel %vm24, %v1000, 0.0
  %1007 = vadd.xlane.f32.xlu0 %v1006
  %v1008 = vpop.xlane.xlu0 %1007
  %v1009 = vmul.f32 %v1005, %v760
  %v1010 = vmul.f32 %v1008, %v760
  %v1011 = vsub.f32 %v999, %v1009
  %v1012 = vsub.f32 %v1000, %v1010
  %v1013 = vmul.f32 %v1011, %v1011
  %v1014 = vmul.f32 %v1012, %v1012
  %v1015 = vsel %vm24, %v1013, 0.0
  %1016 = vadd.xlane.f32.xlu0 %v1015
  %v1017 = vpop.xlane.xlu0 %1016
  %v1018 = vsel %vm24, %v1014, 0.0
  %1019 = vadd.xlane.f32.xlu0 %v1018
  %v1020 = vpop.xlane.xlu0 %1019
  %v1021 = vmul.f32 %v1017, %v760
  %v1022 = vmul.f32 %v1020, %v760
  %v1023 = vadd.f32 %v1021, 1e-05
  %v1024 = vadd.f32 %v1022, 1e-05
  %v1025 = vrsqrt.pop %v1023
  %v1026 = vrsqrt.pop %v1024
  %v1027 = vmul.f32 %v1011, %v1025
  %v1028 = vmul.f32 %v1012, %v1026
  %v1029 = vlaneseq
  %v1030 = vshrl.u32 %v1029, 7
  %v1031 = vsub.s32 0, %v1030
  %v1032 = vrot.slane %v1001, %v1031
  %v1033 = vmul.f32 %v1027, %v1032
  %v1034 = vmul.f32 %v1028, %v1032
  %v1035 = vlaneseq
  %v1036 = vshrl.u32 %v1035, 7
  %v1037 = vsub.s32 0, %v1036
  %v1038 = vrot.slane %v1002, %v1037
  %v1039 = vadd.f32 %v1033, %v1038
  %v1040 = vadd.f32 %v1034, %v1038
  %v1041 = vld [vmem:[%s1 + $0xca] sm:$0x1]
  %v1042 = vld [vmem:[%s1 + $0xcb] sm:$0x1]
  %1044 = vset.pattern.permute.xlu0 0
  %1045 = vperm.xlu0 %1044, %v1042
  %v1046 = vpop.permute.xlu0 %1045
  %v1049 = vsel %vm24, %v1041, 0
  %v1052 = vsel %vm24, %v1039, 0
  %v1055 = vsel %vm24, %v1040, 0
  %1057 = vmatprep.subr.mxu0 0.0
  %1058 = vmatpush1.xpose.msra.mxu0 %v1052
  %1059 = vmatprep.subr.mxu0 0.0
  %1060 = vmatpush1.xpose.msra.mxu0 %v1055
  %1061 = vmatprep.subr.mxu0 0.0
  %1062 = vmatpush1.xpose.msra.mxu0 0.0
  %1063 = vmatprep.subr.mxu0 0.0
  %1064 = vmatpush1.xpose.msra.mxu0 0.0
  %1065 = vmatprep.subr.mxu0 0.0
  %1066 = vmatpush1.xpose.msra.mxu0 0.0
  %1067 = vmatprep.subr.mxu0 0.0
  %1068 = vmatpush1.xpose.msra.mxu0 0.0
  %1069 = vmatprep.subr.mxu0 0.0
  %1070 = vmatpush1.xpose.msra.mxu0 0.0
  %1071 = vmatprep.subr.mxu0 0.0
  %1072 = vmatpush1.xpose.msra.mxu0 0.0
  %1073 = vmatprep.subr.mxu0 0.0
  %1074 = vmatpush1.xpose.msra.mxu0 0.0
  %1075 = vmatprep.subr.mxu0 0.0
  %1076 = vmatpush1.xpose.msra.mxu0 0.0
  %1077 = vmatprep.subr.mxu0 0.0
  %1078 = vmatpush1.xpose.msra.mxu0 0.0
  %1079 = vmatprep.subr.mxu0 0.0
  %1080 = vmatpush1.xpose.msra.mxu0 0.0
  %1081 = vmatprep.subr.mxu0 0.0
  %1082 = vmatpush1.xpose.msra.mxu0 0.0
  %1083 = vmatprep.subr.mxu0 0.0
  %1084 = vmatpush1.xpose.msra.mxu0 0.0
  %1085 = vmatprep.subr.mxu0 0.0
  %1086 = vmatpush1.xpose.msra.mxu0 0.0
  %1087 = vmatprep.subr.mxu0 0.0
  %1088 = vmatpush1.xpose.msra.mxu0 0.0
  %1089 = vmatprep.subr.mxu0 0.0
  %1090 = vmatpush1.xpose.msra.mxu0 0.0
  %1091 = vmatprep.subr.mxu0 0.0
  %1092 = vmatpush1.xpose.msra.mxu0 0.0
  %1093 = vmatprep.subr.mxu0 0.0
  %1094 = vmatpush1.xpose.msra.mxu0 0.0
  %1095 = vmatprep.subr.mxu0 0.0
  %1096 = vmatpush1.xpose.msra.mxu0 0.0
  %1097 = vmatprep.subr.mxu0 0.0
  %1098 = vmatpush1.xpose.msra.mxu0 0.0
  %1099 = vmatprep.subr.mxu0 0.0
  %1100 = vmatpush1.xpose.msra.mxu0 0.0
  %1101 = vmatprep.subr.mxu0 0.0
  %1102 = vmatpush1.xpose.msra.mxu0 0.0
  %1103 = vmatprep.subr.mxu0 0.0
  %1104 = vmatpush1.xpose.msra.mxu0 0.0
  %1105 = vmatprep.subr.mxu0 0.0
  %1106 = vmatpush1.xpose.msra.mxu0 0.0
  %1107 = vmatprep.subr.mxu0 0.0
  %1108 = vmatpush1.xpose.msra.mxu0 0.0
  %1109 = vmatprep.subr.mxu0 0.0
  %1110 = vmatpush1.xpose.msra.mxu0 0.0
  %1111 = vmatprep.subr.mxu0 0.0
  %1112 = vmatpush1.xpose.msra.mxu0 0.0
  %1113 = vmatprep.subr.mxu0 0.0
  %1114 = vmatpush1.xpose.msra.mxu0 0.0
  %1115 = vmatprep.subr.mxu0 0.0
  %1116 = vmatpush1.xpose.msra.mxu0 0.0
  %1117 = vmatprep.subr.mxu0 0.0
  %1118 = vmatpush1.xpose.msra.mxu0 0.0
  %1119 = vmatprep.subr.mxu0 0.0
  %1120 = vmatpush1.xpose.msra.mxu0 0.0
  %1121 = vmatprep.mubr.f32.mxu0 0.0
  %1122 = vmatmul.mubr.f32.gmra.mrb[0].mxu0 %v1049
  %v1123 = vpop.f32.mrb[0].mxu0
  %v1124 = vadd.f32 %v1046, %v1123
  %v1125 = vpop.f32.mrb[0].mxu0
  %1126 = vdwg.mxu0
  %v1127 = vxor.u32 %v1124, 2147483648
  %v1128 = vmul.f32 %v1127, 1.442695
  %v1129 = vpow.pop %v1128
  %v1130 = vadd.f32 %v1129, 1.0
  %v1131 = vrcp.pop %v1130
  %v1132 = vmul.f32 1.0, %v1131
  %vm1133 = vcmask 122880
  %1134 = vst.msk [vmem:[%s2] sm:$0x1] %vm1133, %v1132
  // Predicated region
  $region10: #{sakt_forward.1} parent=0 // pred_check
    _
  $region11: #{sakt_forward.1} parent=0 // pred_check_branch
    %1136 = sbr.rel (0) target = $region13
  $region12: #{sakt_forward.1} parent=0 // pred_region
    _
  $region13: #{sakt_forward.1} parent=0 // pred_fallthru
    _
  // Predicated region
  $region14: #{sakt_forward.1} parent=0 // pred_check
    _
  $region15: #{sakt_forward.1} parent=0 // pred_check_branch
    %1138 = sbr.rel (0) target = $region17
  $region16: #{sakt_forward.1} parent=0 // pred_region
    _
  $region17: #{sakt_forward.1} parent=0 // pred_fallthru
    _

</llo_original>
